<compile_context>
chip_gen: v7x
topology: tpu7x:2x2x1
jax: 0.10.0
libtpu: 0.0.40
codegen_flags: <defaults>
</compile_context>

<pallas_src>
import functools

import jax
import jax.numpy as jnp
from jax import lax
from jax.experimental import pallas as pl
from jax.experimental.pallas import tpu as pltpu


def _sinkhorn_kernel(c_ref, src_ref, tgt_ref, p_ref, cost_ref, *, eps, reg, max_iter):
    C = c_ref[...].astype(jnp.float32)        # (n, m)
    src = src_ref[...].astype(jnp.float32)    # (n, 1) column (row scaling of M)
    tgt = tgt_ref[...].astype(jnp.float32)    # (1, m) lane-dense row (col scaling)

    M = jnp.exp(-C / reg)                     # Gibbs kernel (n, m); no M.T needed
    # TODO(synk): exp(-C/reg) can underflow for small reg, making src/(M@v) inf/NaN;
    # this matches the PyTorch module's behavior (a log-domain form would be safer).

    eps2 = jnp.float32(eps) * jnp.float32(eps)

    u0 = jnp.ones_like(src)                   # (n, 1)  torch.ones_like(source)
    v0 = jnp.ones_like(tgt)                   # (1, m)  torch.ones_like(target)

    # Carry only vectors + scalars: (it, converged, u, v).  Entering iteration k
    # the carried (u, v) hold the previous iteration's scalings, so they double
    # as (u_prev, v_prev) for the Frobenius check; P_prev = M * (u v^T) is never
    # materialized across iterations.
    def cond(carry):
        it, conv, _, _ = carry
        return jnp.logical_and(it < max_iter, jnp.logical_not(conv))

    def body(carry):
        it, _, u, v = carry
        # M @ v  -> VPU multiply + cross-lane (XLU) reduce; avoids 1-col MXU matvec.
        Mv = jnp.sum(M * v, axis=1, keepdims=True)             # (n, 1)
        u_new = src / Mv                                       # (n, 1)
        # M.T @ u -> VPU multiply + sublane reduce (no materialized transpose).
        MTu = jnp.sum(M * u_new, axis=0, keepdims=True)        # (1, m)
        v_new = tgt / MTu                                      # (1, m)
        # ||P_new - P_prev||_F^2 = sum((M * (u_new v_new^T - u v^T))^2)
        D = u_new * v_new - u * v                              # (n, m) outer-prod diff
        err2 = jnp.sum((M * D) ** 2)
        conv_new = err2 < eps2
        # torch skips the P_prev update on the breaking iteration, but the loop
        # terminates immediately afterwards, so returning (u_new, v_new)
        # unconditionally gives identical results.
        return (it + 1, conv_new, u_new, v_new)

    init = (jnp.int32(0), jnp.zeros((), dtype=jnp.bool_), u0, v0)
    _, _, u, v = lax.while_loop(cond, body, init)

    P = u * M * v                                              # diag(u) @ M @ diag(v)
    p_ref[...] = P.astype(p_ref.dtype)
    cost_ref[...] = jnp.sum(P * C, keepdims=True)              # (1, 1)


def sinkhorn_distance(cost_matrix, source, target, *, eps, reg, max_iter):
    n, m = cost_matrix.shape
    src = source.reshape(n, 1).astype(jnp.float32)   # column: scales rows of M
    tgt = target.reshape(1, m).astype(jnp.float32)   # lane-dense row: scales cols of M

    # Live set ~ C + M + a few (n, m) temporaries; cap at v7x's 64 MiB physical VMEM.
    mat_bytes = n * m * 4
    vmem_limit = int(min(max(8 * mat_bytes + (1 << 20), 4 << 20), 64 << 20))

    # Advisory scheduling hint: ~10 (n, m)-sized VPU passes per iteration, one exp
    # per element, and ~3 (n, m) arrays of HBM traffic.
    cost_estimate = pl.CostEstimate(
        flops=10 * max_iter * n * m,
        transcendentals=n * m,
        bytes_accessed=3 * mat_bytes,
    )

    kernel = functools.partial(_sinkhorn_kernel, eps=eps, reg=reg, max_iter=max_iter)
    P, min_cost = pl.pallas_call(
        kernel,
        out_shape=(
            jax.ShapeDtypeStruct((n, m), jnp.float32),
            jax.ShapeDtypeStruct((1, 1), jnp.float32),
        ),
        in_specs=[
            pl.BlockSpec(memory_space=pltpu.MemorySpace.VMEM),
            pl.BlockSpec(memory_space=pltpu.MemorySpace.VMEM),
            pl.BlockSpec(memory_space=pltpu.MemorySpace.VMEM),
        ],
        out_specs=(
            pl.BlockSpec(memory_space=pltpu.MemorySpace.VMEM),
            pl.BlockSpec(memory_space=pltpu.MemorySpace.VMEM),
        ),
        compiler_params=pltpu.CompilerParams(vmem_limit_bytes=vmem_limit),
        cost_estimate=cost_estimate,
    )(cost_matrix.astype(jnp.float32), src, tgt)
    return P, min_cost[0, 0]


def sinkhorn_reference(cost_matrix, source, target, eps, reg, max_iter):
    """Plain-JAX transcription of the PyTorch module (Python loop + break)."""
    M = jnp.exp(-cost_matrix / reg)
    u = jnp.ones_like(source)
    v = jnp.ones_like(target)
    P = jnp.diag(u) @ M @ jnp.diag(v)
    P_prev = P
    for _ in range(max_iter):
        u = source / (M @ v)
        v = target / (M.T @ u)
        P = jnp.diag(u) @ M @ jnp.diag(v)
        err = jnp.sqrt(jnp.sum((P_prev - P) ** 2))
        if float(err) < eps:
            break
        P_prev = P
    return P, jnp.sum(P * cost_matrix)


if __name__ == "__main__":
    key = jax.random.PRNGKey(0)
    k1, k2, k3 = jax.random.split(key, 3)

    n, m = 16, 16
    cost = jax.random.uniform(k1, (n, m), dtype=jnp.float32)
    source = jax.nn.softmax(jax.random.normal(k2, (n,), dtype=jnp.float32))
    target = jax.nn.softmax(jax.random.normal(k3, (m,), dtype=jnp.float32))

    eps, reg, max_iter = 1e-3, 0.1, 100

    P, min_cost = sinkhorn_distance(cost, source, target, eps=eps, reg=reg, max_iter=max_iter)
    jax.block_until_ready((P, min_cost))

    P_ref, cost_ref = sinkhorn_reference(cost, source, target, eps, reg, max_iter)
    assert jnp.allclose(P, P_ref, atol=5e-3), "transport plan mismatch"
    assert jnp.allclose(min_cost, cost_ref, atol=5e-3), "min_cost mismatch"

    print("KERNEL_OK")
</pallas_src>

<mosaic_0001>
module attributes {stable_mosaic.version = 11 : i64} {
  func.func @_sinkhorn_kernel(%arg0: memref<16x16xf32, #tpu.memory_space<vmem>>, %arg1: memref<16x1xf32, #tpu.memory_space<vmem>>, %arg2: memref<1x16xf32, #tpu.memory_space<vmem>>, %arg3: memref<16x16xf32, #tpu.memory_space<vmem>>, %arg4: memref<1x1xf32, #tpu.memory_space<vmem>>) attributes {dimension_semantics = [], scalar_prefetch = 0 : i64, scratch_operands = 0 : i64, tpu.core_type = #tpu.core_type<tc>} {
    %c0 = arith.constant 0 : index
    %c0_0 = arith.constant 0 : index
    %0 = vector.load %arg0[%c0, %c0_0] : memref<16x16xf32, #tpu.memory_space<vmem>>, vector<16x16xf32>
    %c0_1 = arith.constant 0 : index
    %c0_2 = arith.constant 0 : index
    %1 = vector.load %arg1[%c0_1, %c0_2] : memref<16x1xf32, #tpu.memory_space<vmem>>, vector<16x1xf32>
    %c0_3 = arith.constant 0 : index
    %c0_4 = arith.constant 0 : index
    %2 = vector.load %arg2[%c0_3, %c0_4] : memref<1x16xf32, #tpu.memory_space<vmem>>, vector<1x16xf32>
    %cst = arith.constant 0.000000e+00 : f32
    %3 = vector.broadcast %cst : f32 to vector<16x16xf32>
    %4 = arith.subf %3, %0 : vector<16x16xf32>
    %cst_5 = arith.constant 1.000000e-01 : f32
    %5 = vector.broadcast %cst_5 : f32 to vector<16x16xf32>
    %6 = arith.divf %4, %5 : vector<16x16xf32>
    %7 = math.exp %6 : vector<16x16xf32>
    %cst_6 = arith.constant 1.000000e-03 : f32
    %cst_7 = arith.constant 1.000000e-03 : f32
    %8 = arith.mulf %cst_6, %cst_7 : f32
    %cst_8 = arith.constant 1.000000e+00 : f32
    %9 = vector.broadcast %cst_8 : f32 to vector<16x1xf32>
    %cst_9 = arith.constant 1.000000e+00 : f32
    %10 = vector.broadcast %cst_9 : f32 to vector<1x16xf32>
    %c0_i32 = arith.constant 0 : i32
    %false = arith.constant false
    %11:4 = scf.while (%arg5 = %c0_i32, %arg6 = %false, %arg7 = %9, %arg8 = %10) : (i32, i1, vector<16x1xf32>, vector<1x16xf32>) -> (i32, i1, vector<16x1xf32>, vector<1x16xf32>) {
      %c100_i32 = arith.constant 100 : i32
      %24 = arith.cmpi slt, %arg5, %c100_i32 : i32
      %true = arith.constant true
      %25 = arith.xori %arg6, %true : i1
      %26 = arith.andi %24, %25 : i1
      scf.condition(%26) %arg5, %arg6, %arg7, %arg8 : i32, i1, vector<16x1xf32>, vector<1x16xf32>
    } do {
    ^bb0(%arg5: i32, %arg6: i1, %arg7: vector<16x1xf32>, %arg8: vector<1x16xf32>):
      %24 = vector.broadcast %arg8 : vector<1x16xf32> to vector<16x16xf32>
      %25 = arith.mulf %7, %24 : vector<16x16xf32>
      %cst_15 = arith.constant dense<0.000000e+00> : vector<16xf32>
      %26 = vector.multi_reduction <add>, %25, %cst_15 [1] : vector<16x16xf32> to vector<16xf32>
      %27 = vector.shape_cast %26 : vector<16xf32> to vector<16x1xf32>
      %28 = arith.divf %1, %27 : vector<16x1xf32>
      %29 = vector.broadcast %28 : vector<16x1xf32> to vector<16x16xf32>
      %30 = arith.mulf %7, %29 : vector<16x16xf32>
      %cst_16 = arith.constant dense<0.000000e+00> : vector<16xf32>
      %31 = vector.multi_reduction <add>, %30, %cst_16 [0] : vector<16x16xf32> to vector<16xf32>
      %32 = vector.shape_cast %31 : vector<16xf32> to vector<1x16xf32>
      %33 = arith.divf %2, %32 : vector<1x16xf32>
      %34 = vector.broadcast %28 : vector<16x1xf32> to vector<16x16xf32>
      %35 = vector.broadcast %33 : vector<1x16xf32> to vector<16x16xf32>
      %36 = arith.mulf %34, %35 : vector<16x16xf32>
      %37 = vector.broadcast %arg7 : vector<16x1xf32> to vector<16x16xf32>
      %38 = vector.broadcast %arg8 : vector<1x16xf32> to vector<16x16xf32>
      %39 = arith.mulf %37, %38 : vector<16x16xf32>
      %40 = arith.subf %36, %39 : vector<16x16xf32>
      %41 = arith.mulf %7, %40 : vector<16x16xf32>
      %42 = arith.mulf %41, %41 : vector<16x16xf32>
      %43 = vector.shape_cast %42 : vector<16x16xf32> to vector<1x16x16xf32>
      %cst_17 = arith.constant dense<0.000000e+00> : vector<1xf32>
      %44 = vector.multi_reduction <add>, %43, %cst_17 [1, 2] : vector<1x16x16xf32> to vector<1xf32>
      %45 = vector.shape_cast %44 : vector<1xf32> to vector<1x1x1xf32>
      %46 = vector.extract %45[0, 0, 0] : f32 from vector<1x1x1xf32>
      %47 = arith.cmpf olt, %46, %8 : f32
      %c1_i32 = arith.constant 1 : i32
      %48 = arith.addi %arg5, %c1_i32 : i32
      scf.yield %48, %47, %28, %33 : i32, i1, vector<16x1xf32>, vector<1x16xf32>
    }
    %12 = vector.broadcast %11#2 : vector<16x1xf32> to vector<16x16xf32>
    %13 = arith.mulf %12, %7 : vector<16x16xf32>
    %14 = vector.broadcast %11#3 : vector<1x16xf32> to vector<16x16xf32>
    %15 = arith.mulf %13, %14 : vector<16x16xf32>
    %c0_10 = arith.constant 0 : index
    %c0_11 = arith.constant 0 : index
    %16 = vector.load %arg3[%c0_10, %c0_11] : memref<16x16xf32, #tpu.memory_space<vmem>>, vector<16x16xf32>
    tpu.vector_store %arg3[%c0_10, %c0_11], %15 {strides = array<i32>} : memref<16x16xf32, #tpu.memory_space<vmem>>, vector<16x16xf32>,
    %17 = arith.mulf %15, %0 : vector<16x16xf32>
    %18 = vector.shape_cast %17 : vector<16x16xf32> to vector<1x16x16xf32>
    %cst_12 = arith.constant dense<0.000000e+00> : vector<1xf32>
    %19 = vector.multi_reduction <add>, %18, %cst_12 [1, 2] : vector<1x16x16xf32> to vector<1xf32>
    %20 = vector.shape_cast %19 : vector<1xf32> to vector<1x1x1xf32>
    %21 = vector.extract %20[0, 0, 0] : f32 from vector<1x1x1xf32>
    %22 = vector.broadcast %21 : f32 to vector<1x1xf32>
    %c0_13 = arith.constant 0 : index
    %c0_14 = arith.constant 0 : index
    %23 = vector.load %arg4[%c0_13, %c0_14] : memref<1x1xf32, #tpu.memory_space<vmem>>, vector<1x1xf32>
    tpu.vector_store %arg4[%c0_13, %c0_14], %22 {strides = array<i32>} : memref<1x1xf32, #tpu.memory_space<vmem>>, vector<1x1xf32>,
    return
  }
}

</mosaic_0001>

<llo_original>
// kernel: tpu_custom_call.1
$region0: #{tpu_custom_call.1}
  #allocation0 [shape = 'u32[]', space=smem, size = 0x4, offset = 0x4, fixed_abs, tag = 'smem constant byte address 0x4 - core index']
  #allocation1 [shape = 'u32[144,128]{1,0:T(1,128)}', space=vmem, size = 0x12000, scoped, tag = 'internal scratch']
  %s0 = inlined_call_operand.vmem [shape: f32[16,16], index: 0, kind: input, shape index: {}]
  %s1 = inlined_call_operand.vmem [shape: f32[16,1], index: 1, kind: input, shape index: {}]
  %s2 = inlined_call_operand.vmem [shape: f32[1,16], index: 2, kind: input, shape index: {}]
  %s3 = inlined_call_operand.hbm [shape: f32[16,16], index: 3, kind: output, shape index: {0}]
  %s4 = inlined_call_operand.hbm [shape: f32[1,1], index: 4, kind: output, shape index: {1}]
  %5 = xla_tuple %s3, %s4
  %s6 = sld [smem:[#allocation0]]
  $region37: #{tpu_custom_call.1} parent=0
    _
  %s8 = ssub.s32 1, %s6
  %s9 = scalar_select 0, %s8, %s6
  $region1: #{tpu_custom_call.1} parent=0
    #allocation2 [shape = 'u8[8192]{0}', space=vmem, size = 0x2000, scoped, tag = 'output window, operand 0, single buffered']
    #allocation3 [shape = 's32[1]{0}', space=sflag, size = 0x4, scoped, tag = 'scoped memory for tpu_custom_call.1']
    #allocation4 [shape = 'u8[512]{0}', space=vmem, size = 0x400, scoped, tag = 'output window, operand 1, single buffered']
    #allocation5 [shape = 's32[1]{0}', space=sflag, size = 0x4, scoped, tag = 'scoped memory for tpu_custom_call.1']
    %10 = vsyncpa [#allocation3], 0
    %11 = vsyncpa [#allocation5], 0
    // Predicated region
    $region2: #{tpu_custom_call.1} parent=1 // pred_check
      _
    $region3: #{tpu_custom_call.1} parent=1 // pred_check_branch
      %13 = sbr.rel (0) target = $region5
    $region4: #{tpu_custom_call.1} parent=1 // pred_region
      _
    $region5: #{tpu_custom_call.1} parent=1 // pred_fallthru
      _
    // Predicated region
    $region6: #{tpu_custom_call.1} parent=1 // pred_check
      _
    $region7: #{tpu_custom_call.1} parent=1 // pred_check_branch
      %15 = sbr.rel (0) target = $region9
    $region8: #{tpu_custom_call.1} parent=1 // pred_region
      _
    $region9: #{tpu_custom_call.1} parent=1 // pred_fallthru
      _
    // Predicated region
    $region10: #{tpu_custom_call.1} parent=1 // pred_check
      _
    $region11: #{tpu_custom_call.1} parent=1 // pred_check_branch
      %17 = sbr.rel (0) target = $region13
    $region12: #{tpu_custom_call.1} parent=1 // pred_region
      _
    $region13: #{tpu_custom_call.1} parent=1 // pred_fallthru
      _
    %v18 = vld [vmem:[%s0] sm:$0xff]
    %v19 = vld [vmem:[%s0 + $0x8] sm:$0xff]
    %v20 = vld [vmem:[%s1] sm:$0xff]
    %v21 = vld [vmem:[%s1 + $0x8] sm:$0xff]
    %v22 = vld [vmem:[%s2] sm:$0x1]
    %v23 = vsub.f32 0.0, %v18
    %v24 = vsub.f32 0.0, %v19
    %v25 = vrcp.pop 0.1
    %v26 = vmul.f32 %v23, %v25
    %v27 = vmul.f32 %v24, %v25
    %v28 = vmul.f32 %v26, 1.442695
    %v29 = vpow.pop %v28
    %v30 = vmul.f32 %v27, 1.442695
    %v31 = vpow.pop %v30
    // While loop
    $region14: #{tpu_custom_call.1} parent=1 // loop_pre_header
      _
    $region15: #{tpu_custom_call.1} parent=1 // loop_header
      %s33 = sphi 0, %s125
      %p34 = pphi 0, %p124
      %v35 = vphi 1.0, %v60
      %v36 = vphi 1.0, %v62
      %v37 = vphi 1.0, %v85
      %p38 = scmp.lt.s32.totalorder %s33, 100
      %p39 = pneg %p34
      %p40 = pnand %p38, %p39
      %p41 = pneg %p40
    $region16: #{tpu_custom_call.1} parent=1 // loop_header_branch
      %43 = sbr.rel (%p40) target = $region20
    $region17: #{tpu_custom_call.1} parent=1 // loop_body
      %v45 = vlaneseq
      %v46 = vshrl.u32 %v45, 7
      %v47 = vsub.s32 0, %v46
      %v48 = vrot.slane %v37, %v47
      %v50 = vmul.f32 %v29, %v48
      %v51 = vmul.f32 %v31, %v48
      %vm52 = vcmask 130048
      %v53 = vsel %vm52, %v50, 0.0
      %54 = vadd.xlane.f32.xlu0 %v53
      %v55 = vpop.xlane.xlu0 %54
      %v56 = vsel %vm52, %v51, 0.0
      %57 = vadd.xlane.f32.xlu0 %v56
      %v58 = vpop.xlane.xlu0 %57
      %v59 = vrcp.pop %v55
      %v60 = vmul.f32 %v20, %v59
      %v61 = vrcp.pop %v58
      %v62 = vmul.f32 %v21, %v61
      %64 = vset.pattern.permute.xlu0 0
      %65 = vperm.xlu0 %64, %v60
      %v66 = vpop.permute.xlu0 %65
      %69 = vset.pattern.permute.xlu0 0
      %70 = vperm.xlu0 %69, %v62
      %v71 = vpop.permute.xlu0 %70
      %v73 = vmul.f32 %v29, %v66
      %v74 = vmul.f32 %v31, %v71
      %v75 = vsel %vm52, %v73, 0.0
      %v76 = vsel %vm52, %v74, 0.0
      %v77 = vadd.f32 %v75, %v76
      %v78 = vrot.slane %v77, 4
      %v79 = vadd.f32 %v77, %v78
      %v80 = vrot.slane %v79, 2
      %v81 = vadd.f32 %v79, %v80
      %v82 = vrot.slane %v81, 1
      %v83 = vadd.f32 %v81, %v82
      %v84 = vrcp.pop %v83
      %v85 = vmul.f32 %v22, %v84
      %v87 = vlaneseq
      %v88 = vshrl.u32 %v87, 7
      %v89 = vsub.s32 0, %v88
      %v90 = vrot.slane %v85, %v89
      %v92 = vmul.f32 %v66, %v90
      %v93 = vmul.f32 %v71, %v90
      %95 = vset.pattern.permute.xlu0 0
      %96 = vperm.xlu0 %95, %v35
      %v97 = vpop.permute.xlu0 %96
      %100 = vset.pattern.permute.xlu0 0
      %101 = vperm.xlu0 %100, %v36
      %v102 = vpop.permute.xlu0 %101
      %v104 = vmul.f32 %v97, %v48
      %v105 = vmul.f32 %v102, %v48
      %v106 = vsub.f32 %v92, %v104
      %v107 = vsub.f32 %v93, %v105
      %v108 = vmul.f32 %v29, %v106
      %v109 = vmul.f32 %v31, %v107
      %v110 = vmul.f32 %v108, %v108
      %v111 = vmul.f32 %v109, %v109
      %v112 = vsel %vm52, %v110, 0.0
      %v113 = vsel %vm52, %v111, 0.0
      %v114 = vadd.f32 %v112, %v113
      %115 = vadd.xlane.f32.xlu0 %v114
      %v116 = vpop.xlane.xlu0 %115
      %v117 = vrot.slane %v116, 4
      %v118 = vadd.f32 %v116, %v117
      %v119 = vrot.slane %v118, 2
      %v120 = vadd.f32 %v118, %v119
      %v121 = vrot.slane %v120, 1
      %v122 = vadd.f32 %v120, %v121
      %s123 = vtos %v122
      %p124 = scmp.lt.f32.partialorder %s123, 1.0000001e-06
      %s125 = sadd.s32 %s33, 1
    $region18: #{tpu_custom_call.1} parent=1 // loop_footer
      _
    $region19: #{tpu_custom_call.1} parent=1 // loop_footer_branch
      %32 = sbr.rel target = $region15
    $region20: #{tpu_custom_call.1} parent=1 // loop_exit
      _
    %127 = vset.pattern.permute.xlu0 0
    %128 = vperm.xlu0 %127, %v35
    %v129 = vpop.permute.xlu0 %128
    %132 = vset.pattern.permute.xlu0 0
    %133 = vperm.xlu0 %132, %v36
    %v134 = vpop.permute.xlu0 %133
    %v136 = vmul.f32 %v129, %v29
    %v137 = vmul.f32 %v134, %v31
    %v139 = vlaneseq
    %v140 = vshrl.u32 %v139, 7
    %v141 = vsub.s32 0, %v140
    %v142 = vrot.slane %v37, %v141
    %v144 = vmul.f32 %v136, %v142
    %v145 = vmul.f32 %v137, %v142
    %vm146 = vcmask 130048
    %147 = vst.msk [vmem:[#allocation2] sm:$0xff] %vm146, %v144
    %148 = vst.msk [vmem:[#allocation2 + $0x8] sm:$0xff] %vm146, %v145
    %v149 = vmul.f32 %v144, %v18
    %v150 = vmul.f32 %v145, %v19
    %v151 = vsel %vm146, %v149, 0.0
    %v152 = vsel %vm146, %v150, 0.0
    %v153 = vadd.f32 %v151, %v152
    %154 = vadd.xlane.f32.xlu0 %v153
    %v155 = vpop.xlane.xlu0 %154
    %v156 = vrot.slane %v155, 4
    %v157 = vadd.f32 %v155, %v156
    %v158 = vrot.slane %v157, 2
    %v159 = vadd.f32 %v157, %v158
    %v160 = vrot.slane %v159, 1
    %v161 = vadd.f32 %v159, %v160
    %s162 = vtos %v161
    %v163 = vstv %s162
    %vm164 = vcmask 0
    %165 = vst.msk [vmem:[#allocation4] sm:$0x1] %vm164, %v163
    // Predicated region
    $region21: #{tpu_custom_call.1} parent=1 // pred_check
      _
    $region22: #{tpu_custom_call.1} parent=1 // pred_check_branch
      %167 = sbr.rel (0) target = $region24
    $region23: #{tpu_custom_call.1} parent=1 // pred_region
      %s169 = ssub.s32 256, 256
      %170 = vsyncadd [#allocation3], %s169
      %s171 = sshll.u32 [#allocation2], 4
      %s172 = int_to_ptr.vmem [resolvable:$true] %s171
      %177 = dma.vmem_to_hbm [thread:$0]  %s172, 256, %s3, [#allocation3], 128, 128, 8
    $region24: #{tpu_custom_call.1} parent=1 // pred_fallthru
      _
    // Predicated region
    $region25: #{tpu_custom_call.1} parent=1 // pred_check
      _
    $region26: #{tpu_custom_call.1} parent=1 // pred_check_branch
      %179 = sbr.rel (0) target = $region28
    $region27: #{tpu_custom_call.1} parent=1 // pred_region
      %s181 = ssub.s32 16, 16
      %182 = vsyncadd [#allocation5], %s181
      %s184 = sshll.u32 [#allocation4], 4
      %s185 = int_to_ptr.vmem [resolvable:$true] %s184
      %187 = dma.vmem_to_hbm [thread:$0]  %s185, 16, %s4, [#allocation5]
    $region28: #{tpu_custom_call.1} parent=1 // pred_fallthru
      _
    // Predicated region
    $region29: #{tpu_custom_call.1} parent=1 // pred_check
      _
    $region30: #{tpu_custom_call.1} parent=1 // pred_check_branch
      %189 = sbr.rel (0) target = $region32
    $region31: #{tpu_custom_call.1} parent=1 // pred_region
      %190 = dma.done [#allocation3], 256
    $region32: #{tpu_custom_call.1} parent=1 // pred_fallthru
      _
    // Predicated region
    $region33: #{tpu_custom_call.1} parent=1 // pred_check
      _
    $region34: #{tpu_custom_call.1} parent=1 // pred_check_branch
      %192 = sbr.rel (0) target = $region36
    $region35: #{tpu_custom_call.1} parent=1 // pred_region
      %193 = dma.done [#allocation5], 16
    $region36: #{tpu_custom_call.1} parent=1 // pred_fallthru
      _
    %194 = vsyncpa [#allocation3], 1
    %195 = vsyncpa [#allocation5], 1

</llo_original>
